<compile_context>
chip_gen: v5e
topology: v5e:2x2
jax: 0.10.0
libtpu: 0.0.40
codegen_flags: <defaults>
</compile_context>

<pallas_src>
import math

import jax
import jax.numpy as jnp
from jax import lax
from jax.experimental import pallas as pl
from jax.experimental.pallas import tpu as pltpu

B, S, D, H = 2, 8, 32, 4        # batch, num_patches, project_dim, num_heads
HD = D // H                      # head dim
EPS = 1e-6                       # matches torch.nn.LayerNorm(project_dim, eps=1e-06)


def _gelu(x):
    # TODO(synk): tanh-approximation GELU (EUP tanh); torch.nn.GELU() default
    # is the exact erf form (max-abs deviation ~3e-4).
    c = 0.7978845608028654  # sqrt(2/pi)
    return 0.5 * x * (1.0 + jnp.tanh(c * (x + 0.044715 * x * x * x)))


def _normalize(x):
    # LayerNorm WITHOUT affine: gain/bias are folded into the following matmul.
    mu = jnp.mean(x, axis=-1, keepdims=True)
    xc = x - mu
    var = jnp.mean(xc * xc, axis=-1, keepdims=True)
    return xc * lax.rsqrt(var + EPS)


def transformer_block_kernel(x_ref, wqkv_ref, wo_ref, w1_ref, w2_ref, vec_ref,
                             out_ref):
    f32 = jnp.float32
    bf16 = jnp.bfloat16
    x = x_ref[...].astype(f32)                       # (B*S, D)

    # ---- unpack the bias slab: (4, 3D), one vector per row, lane-0 aligned ----
    vec = vec_ref[...]
    bqkv = vec[0:1, :]                               # (1, 3D) (q part pre-scaled, LN1 folded)
    bo = vec[1:2, 0:D]                               # (1, D)
    b1 = vec[2:3, 0:2 * D]                           # (1, 2D) (LN2 folded)
    b2 = vec[3:4, 0:D]                               # (1, D)

    # ---- LayerNorm 1 (affine folded into Wqkv) + fused QKV projection ----
    x1 = _normalize(x)
    qkv = jnp.dot(x1.astype(bf16), wqkv_ref[...],
                  preferred_element_type=f32) + bqkv              # (B*S, 3D)
    qkv = qkv.reshape(B, S, 3 * D)                                # free leading split

    # ---- multi-head self-attention (attn dropout = identity in eval) ----
    # Merge (head, batch) into a single batch axis of size H*B and run ONE
    # batched einsum pair + ONE softmax (no per-head matmul chains).
    q = jnp.concatenate([qkv[:, :, h * HD:(h + 1) * HD]
                         for h in range(H)], axis=0)              # (H*B, S, HD)
    k = jnp.concatenate([qkv[:, :, D + h * HD:D + (h + 1) * HD]
                         for h in range(H)], axis=0)
    v = jnp.concatenate([qkv[:, :, 2 * D + h * HD:2 * D + (h + 1) * HD]
                         for h in range(H)], axis=0)
    s = jnp.einsum('bqd,bkd->bqk', q.astype(bf16), k.astype(bf16),
                   preferred_element_type=f32)                    # (H*B, S, S)
    s = s - jnp.max(s, axis=-1, keepdims=True)
    p = jnp.exp(s)
    p = p / jnp.sum(p, axis=-1, keepdims=True)                    # exact divide
    o = jnp.einsum('bqk,bkd->bqd', p.astype(bf16), v.astype(bf16),
                   preferred_element_type=f32)                    # (H*B, S, HD)
    attn = jnp.concatenate([o[h * B:(h + 1) * B]
                            for h in range(H)], axis=-1)          # (B, S, D)
    attn = attn.reshape(B * S, D)
    attn = jnp.dot(attn.astype(bf16), wo_ref[...],
                   preferred_element_type=f32) + bo

    # ---- residual 1 ----
    x2 = attn + x

    # ---- LayerNorm 2 (affine folded into W1) + MLP (GELU after BOTH linears,
    #      per the reference forward) ----
    x3 = _normalize(x2)
    h1 = _gelu(jnp.dot(x3.astype(bf16), w1_ref[...],
                       preferred_element_type=f32) + b1)
    h2 = _gelu(jnp.dot(h1.astype(bf16), w2_ref[...],
                       preferred_element_type=f32) + b2)

    # ---- residual 2 ----
    out_ref[...] = (h2 + x2).astype(out_ref.dtype)


def transformer_block(x, params):
    wqkv, wo, w1, w2, vecs = params
    b_, s_, d_ = x.shape
    bs = b_ * s_
    x2d = x.reshape(bs, d_)                          # free reshape in XLA

    # Advisory cost estimate for XLA scheduling around the custom call.
    flops = (2 * bs * d_ * (3 * d_)                  # qkv projection
             + 4 * b_ * s_ * s_ * d_                 # scores + p@v (all heads)
             + 2 * bs * d_ * d_                      # output projection
             + 4 * bs * d_ * (2 * d_))               # two MLP matmuls
    transcendentals = b_ * H * s_ * s_ + bs * 3 * d_  # exp + 2x tanh-GELU
    bytes_accessed = (2 * (wqkv.size + wo.size + w1.size + w2.size)  # bf16 weights
                      + 4 * vecs.size                                 # f32 bias slab
                      + 4 * 2 * bs * d_)                              # f32 act in/out

    vmem = pl.BlockSpec(memory_space=pltpu.MemorySpace.VMEM)
    out = pl.pallas_call(
        transformer_block_kernel,
        out_shape=jax.ShapeDtypeStruct((bs, d_), x.dtype),
        in_specs=[vmem] * 6,
        out_specs=vmem,
        cost_estimate=pl.CostEstimate(flops=flops,
                                      transcendentals=transcendentals,
                                      bytes_accessed=bytes_accessed),
    )(x2d, wqkv, wo, w1, w2, vecs)
    return out.reshape(b_, s_, d_)


def init_params(key, d):
    """Deterministic synthetic parameters matching the torch module's shapes,
    pre-transposed / fused / LN-folded / packed for the kernel."""
    hd = d // H
    ks = jax.random.split(key, 8)
    std = 0.02
    in_proj_w = jax.random.normal(ks[0], (3 * d, d), jnp.float32) * std
    in_proj_b = jax.random.normal(ks[1], (3 * d,), jnp.float32) * std
    out_w = jax.random.normal(ks[2], (d, d), jnp.float32) * std
    out_b = jnp.zeros((d,), jnp.float32)
    w1 = jax.random.normal(ks[3], (2 * d, d), jnp.float32) * std   # Linear(d, 2d)
    b1 = jax.random.normal(ks[4], (2 * d,), jnp.float32) * std
    w2 = jax.random.normal(ks[5], (d, 2 * d), jnp.float32) * std   # Linear(2d, d)
    b2 = jax.random.normal(ks[6], (d,), jnp.float32) * std
    ln1_g = jnp.ones((d,), jnp.float32)
    ln1_b = jnp.zeros((d,), jnp.float32)
    ln2_g = jnp.ones((d,), jnp.float32)
    ln2_b = jnp.zeros((d,), jnp.float32)

    # Split in_proj, fold 1/sqrt(head_dim) into the Q projection (one-time).
    scale = 1.0 / math.sqrt(hd)
    wq, wk, wv = in_proj_w[:d] * scale, in_proj_w[d:2 * d], in_proj_w[2 * d:]
    bq, bk, bv = in_proj_b[:d] * scale, in_proj_b[d:2 * d], in_proj_b[2 * d:]

    # Pre-transpose Linear weights to (in, out); fuse QKV along the out dim.
    wqkv_t = jnp.concatenate([wq.T, wk.T, wv.T], axis=1)       # (d, 3d)
    bqkv = jnp.concatenate([bq, bk, bv])                       # (3d,)
    wo_t = out_w.T                                             # (d, d)
    w1_t = w1.T                                                # (d, 2d)
    w2_t = w2.T                                                # (2d, d)

    # Fold LayerNorm affines into the adjacent matmuls:
    #   x_hat @ (diag(g) @ W) + (b_ln @ W + b)    (bias pushed through W, NOT W')
    wqkv_f = ln1_g[:, None] * wqkv_t
    bqkv_f = ln1_b @ wqkv_t + bqkv
    w1_f = ln2_g[:, None] * w1_t
    b1_f = ln2_b @ w1_t + b1

    # Pack the remaining 1-D params one-per-sublane-row, lane-0 aligned: (4, 3d)
    def _pad(vv):
        return jnp.pad(vv, (0, 3 * d - vv.shape[0]))
    vecs = jnp.stack([bqkv_f, _pad(out_b), _pad(b1_f), _pad(b2)]
                     ).astype(jnp.float32)                     # (4, 3d)

    bf16 = jnp.bfloat16
    return (wqkv_f.astype(bf16), wo_t.astype(bf16),
            w1_f.astype(bf16), w2_t.astype(bf16), vecs)


if __name__ == "__main__":
    # TODO(synk): Dropout(p=0.1) layers are treated as identity (eval mode) and
    # the discarded attention_weights output is not computed; GELU uses the
    # tanh approximation; matmul operands run in bf16 with f32 accumulation.
    key = jax.random.PRNGKey(0)
    kx, kp = jax.random.split(key)
    x = jax.random.normal(kx, (B, S, D), jnp.float32)
    params = init_params(kp, D)
    out = transformer_block(x, params)
    jax.block_until_ready(out)
    assert out.shape == (B, S, D) and out.dtype == jnp.float32
    print("KERNEL_OK")
</pallas_src>

<mosaic_0001>
module attributes {stable_mosaic.version = 11 : i64} {
  func.func @transformer_block_kernel(%arg0: memref<16x32xf32, #tpu.memory_space<vmem>>, %arg1: memref<32x96xbf16, #tpu.memory_space<vmem>>, %arg2: memref<32x32xbf16, #tpu.memory_space<vmem>>, %arg3: memref<32x64xbf16, #tpu.memory_space<vmem>>, %arg4: memref<64x32xbf16, #tpu.memory_space<vmem>>, %arg5: memref<4x96xf32, #tpu.memory_space<vmem>>, %arg6: memref<16x32xf32, #tpu.memory_space<vmem>>) attributes {dimension_semantics = [], scalar_prefetch = 0 : i64, scratch_operands = 0 : i64, tpu.core_type = #tpu.core_type<tc>} {
    %c0 = arith.constant 0 : index
    %c0_0 = arith.constant 0 : index
    %0 = vector.load %arg0[%c0, %c0_0] : memref<16x32xf32, #tpu.memory_space<vmem>>, vector<16x32xf32>
    %c0_1 = arith.constant 0 : index
    %c0_2 = arith.constant 0 : index
    %1 = vector.load %arg5[%c0_1, %c0_2] : memref<4x96xf32, #tpu.memory_space<vmem>>, vector<4x96xf32>
    %2 = vector.extract_strided_slice %1 {offsets = [0, 0], sizes = [1, 96], strides = [1, 1]} : vector<4x96xf32> to vector<1x96xf32>
    %3 = vector.extract_strided_slice %1 {offsets = [1, 0], sizes = [1, 32], strides = [1, 1]} : vector<4x96xf32> to vector<1x32xf32>
    %4 = vector.extract_strided_slice %1 {offsets = [2, 0], sizes = [1, 64], strides = [1, 1]} : vector<4x96xf32> to vector<1x64xf32>
    %5 = vector.extract_strided_slice %1 {offsets = [3, 0], sizes = [1, 32], strides = [1, 1]} : vector<4x96xf32> to vector<1x32xf32>
    %cst = arith.constant dense<0.000000e+00> : vector<16xf32>
    %6 = vector.multi_reduction <add>, %0, %cst [1] : vector<16x32xf32> to vector<16xf32>
    %7 = vector.shape_cast %6 : vector<16xf32> to vector<16x1xf32>
    %cst_3 = arith.constant 3.200000e+01 : f32
    %8 = vector.broadcast %cst_3 : f32 to vector<16x1xf32>
    %9 = arith.divf %7, %8 : vector<16x1xf32>
    %10 = vector.broadcast %9 : vector<16x1xf32> to vector<16x32xf32>
    %11 = arith.subf %0, %10 : vector<16x32xf32>
    %12 = arith.mulf %11, %11 : vector<16x32xf32>
    %cst_4 = arith.constant dense<0.000000e+00> : vector<16xf32>
    %13 = vector.multi_reduction <add>, %12, %cst_4 [1] : vector<16x32xf32> to vector<16xf32>
    %14 = vector.shape_cast %13 : vector<16xf32> to vector<16x1xf32>
    %cst_5 = arith.constant 3.200000e+01 : f32
    %15 = vector.broadcast %cst_5 : f32 to vector<16x1xf32>
    %16 = arith.divf %14, %15 : vector<16x1xf32>
    %cst_6 = arith.constant 9.99999997E-7 : f32
    %17 = vector.broadcast %cst_6 : f32 to vector<16x1xf32>
    %18 = arith.addf %16, %17 : vector<16x1xf32>
    %19 = math.rsqrt %18 : vector<16x1xf32>
    %20 = vector.broadcast %19 : vector<16x1xf32> to vector<16x32xf32>
    %21 = arith.mulf %11, %20 : vector<16x32xf32>
    %22 = arith.truncf %21 : vector<16x32xf32> to vector<16x32xbf16>
    %c0_7 = arith.constant 0 : index
    %c0_8 = arith.constant 0 : index
    %23 = vector.load %arg1[%c0_7, %c0_8] : memref<32x96xbf16, #tpu.memory_space<vmem>>, vector<32x96xbf16>
    %cst_9 = arith.constant dense<0.000000e+00> : vector<16x96xf32>
    %24 = tpu.matmul %22, %23, %cst_9 {dimension_numbers = #tpu.dot_dimension_numbers<[1], [0], [0], [1], [0, 0, 1, 1], [], []>} : vector<16x32xbf16>, vector<32x96xbf16>, vector<16x96xf32> -> vector<16x96xf32>
    %25 = vector.broadcast %2 : vector<1x96xf32> to vector<16x96xf32>
    %26 = arith.addf %24, %25 : vector<16x96xf32>
    %27 = vector.shape_cast %26 : vector<16x96xf32> to vector<2x8x96xf32>
    %28 = vector.extract_strided_slice %27 {offsets = [0, 0, 0], sizes = [2, 8, 8], strides = [1, 1, 1]} : vector<2x8x96xf32> to vector<2x8x8xf32>
    %29 = vector.extract_strided_slice %27 {offsets = [0, 0, 8], sizes = [2, 8, 8], strides = [1, 1, 1]} : vector<2x8x96xf32> to vector<2x8x8xf32>
    %30 = vector.extract_strided_slice %27 {offsets = [0, 0, 16], sizes = [2, 8, 8], strides = [1, 1, 1]} : vector<2x8x96xf32> to vector<2x8x8xf32>
    %31 = vector.extract_strided_slice %27 {offsets = [0, 0, 24], sizes = [2, 8, 8], strides = [1, 1, 1]} : vector<2x8x96xf32> to vector<2x8x8xf32>
    %32 = tpu.concatenate %28, %29, %30, %31 in 0 : vector<2x8x8xf32>, vector<2x8x8xf32>, vector<2x8x8xf32>, vector<2x8x8xf32> -> vector<8x8x8xf32>
    %33 = vector.extract_strided_slice %27 {offsets = [0, 0, 32], sizes = [2, 8, 8], strides = [1, 1, 1]} : vector<2x8x96xf32> to vector<2x8x8xf32>
    %34 = vector.extract_strided_slice %27 {offsets = [0, 0, 40], sizes = [2, 8, 8], strides = [1, 1, 1]} : vector<2x8x96xf32> to vector<2x8x8xf32>
    %35 = vector.extract_strided_slice %27 {offsets = [0, 0, 48], sizes = [2, 8, 8], strides = [1, 1, 1]} : vector<2x8x96xf32> to vector<2x8x8xf32>
    %36 = vector.extract_strided_slice %27 {offsets = [0, 0, 56], sizes = [2, 8, 8], strides = [1, 1, 1]} : vector<2x8x96xf32> to vector<2x8x8xf32>
    %37 = tpu.concatenate %33, %34, %35, %36 in 0 : vector<2x8x8xf32>, vector<2x8x8xf32>, vector<2x8x8xf32>, vector<2x8x8xf32> -> vector<8x8x8xf32>
    %38 = vector.extract_strided_slice %27 {offsets = [0, 0, 64], sizes = [2, 8, 8], strides = [1, 1, 1]} : vector<2x8x96xf32> to vector<2x8x8xf32>
    %39 = vector.extract_strided_slice %27 {offsets = [0, 0, 72], sizes = [2, 8, 8], strides = [1, 1, 1]} : vector<2x8x96xf32> to vector<2x8x8xf32>
    %40 = vector.extract_strided_slice %27 {offsets = [0, 0, 80], sizes = [2, 8, 8], strides = [1, 1, 1]} : vector<2x8x96xf32> to vector<2x8x8xf32>
    %41 = vector.extract_strided_slice %27 {offsets = [0, 0, 88], sizes = [2, 8, 8], strides = [1, 1, 1]} : vector<2x8x96xf32> to vector<2x8x8xf32>
    %42 = tpu.concatenate %38, %39, %40, %41 in 0 : vector<2x8x8xf32>, vector<2x8x8xf32>, vector<2x8x8xf32>, vector<2x8x8xf32> -> vector<8x8x8xf32>
    %43 = arith.truncf %32 : vector<8x8x8xf32> to vector<8x8x8xbf16>
    %44 = arith.truncf %37 : vector<8x8x8xf32> to vector<8x8x8xbf16>
    "tpu.trace_start"() <{level = 10 : i32, message = "bqd,bkd->bqk"}> : () -> ()
    %cst_10 = arith.constant dense<0.000000e+00> : vector<8x8x8xf32>
    %45 = tpu.matmul %43, %44, %cst_10 {dimension_numbers = #tpu.dot_dimension_numbers<[2], [2], [1], [1], [0, 0, 0, 1, 1, 1], [0], [0]>} : vector<8x8x8xbf16>, vector<8x8x8xbf16>, vector<8x8x8xf32> -> vector<8x8x8xf32>
    "tpu.trace_stop"() : () -> ()
    %cst_11 = arith.constant dense<0xFF800000> : vector<8x8xf32>
    %46 = vector.multi_reduction <maximumf>, %45, %cst_11 [2] : vector<8x8x8xf32> to vector<8x8xf32>
    %47 = vector.shape_cast %46 : vector<8x8xf32> to vector<8x8x1xf32>
    %48 = vector.broadcast %47 : vector<8x8x1xf32> to vector<8x8x8xf32>
    %49 = arith.subf %45, %48 : vector<8x8x8xf32>
    %50 = math.exp %49 : vector<8x8x8xf32>
    %cst_12 = arith.constant dense<0.000000e+00> : vector<8x8xf32>
    %51 = vector.multi_reduction <add>, %50, %cst_12 [2] : vector<8x8x8xf32> to vector<8x8xf32>
    %52 = vector.shape_cast %51 : vector<8x8xf32> to vector<8x8x1xf32>
    %53 = vector.broadcast %52 : vector<8x8x1xf32> to vector<8x8x8xf32>
    %54 = arith.divf %50, %53 : vector<8x8x8xf32>
    %55 = arith.truncf %54 : vector<8x8x8xf32> to vector<8x8x8xbf16>
    %56 = arith.truncf %42 : vector<8x8x8xf32> to vector<8x8x8xbf16>
    "tpu.trace_start"() <{level = 10 : i32, message = "bqk,bkd->bqd"}> : () -> ()
    %cst_13 = arith.constant dense<0.000000e+00> : vector<8x8x8xf32>
    %57 = tpu.matmul %55, %56, %cst_13 {dimension_numbers = #tpu.dot_dimension_numbers<[2], [1], [1], [2], [0, 0, 0, 1, 1, 2], [0], [0]>} : vector<8x8x8xbf16>, vector<8x8x8xbf16>, vector<8x8x8xf32> -> vector<8x8x8xf32>
    "tpu.trace_stop"() : () -> ()
    %58 = vector.extract_strided_slice %57 {offsets = [0, 0, 0], sizes = [2, 8, 8], strides = [1, 1, 1]} : vector<8x8x8xf32> to vector<2x8x8xf32>
    %59 = vector.extract_strided_slice %57 {offsets = [2, 0, 0], sizes = [2, 8, 8], strides = [1, 1, 1]} : vector<8x8x8xf32> to vector<2x8x8xf32>
    %60 = vector.extract_strided_slice %57 {offsets = [4, 0, 0], sizes = [2, 8, 8], strides = [1, 1, 1]} : vector<8x8x8xf32> to vector<2x8x8xf32>
    %61 = vector.extract_strided_slice %57 {offsets = [6, 0, 0], sizes = [2, 8, 8], strides = [1, 1, 1]} : vector<8x8x8xf32> to vector<2x8x8xf32>
    %62 = tpu.concatenate %58, %59, %60, %61 in 2 : vector<2x8x8xf32>, vector<2x8x8xf32>, vector<2x8x8xf32>, vector<2x8x8xf32> -> vector<2x8x32xf32>
    %63 = vector.shape_cast %62 : vector<2x8x32xf32> to vector<16x32xf32>
    %64 = arith.truncf %63 : vector<16x32xf32> to vector<16x32xbf16>
    %c0_14 = arith.constant 0 : index
    %c0_15 = arith.constant 0 : index
    %65 = vector.load %arg2[%c0_14, %c0_15] : memref<32x32xbf16, #tpu.memory_space<vmem>>, vector<32x32xbf16>
    %cst_16 = arith.constant dense<0.000000e+00> : vector<16x32xf32>
    %66 = tpu.matmul %64, %65, %cst_16 {dimension_numbers = #tpu.dot_dimension_numbers<[1], [0], [0], [1], [0, 0, 1, 1], [], []>} : vector<16x32xbf16>, vector<32x32xbf16>, vector<16x32xf32> -> vector<16x32xf32>
    %67 = vector.broadcast %3 : vector<1x32xf32> to vector<16x32xf32>
    %68 = arith.addf %66, %67 : vector<16x32xf32>
    %69 = arith.addf %68, %0 : vector<16x32xf32>
    %cst_17 = arith.constant dense<0.000000e+00> : vector<16xf32>
    %70 = vector.multi_reduction <add>, %69, %cst_17 [1] : vector<16x32xf32> to vector<16xf32>
    %71 = vector.shape_cast %70 : vector<16xf32> to vector<16x1xf32>
    %cst_18 = arith.constant 3.200000e+01 : f32
    %72 = vector.broadcast %cst_18 : f32 to vector<16x1xf32>
    %73 = arith.divf %71, %72 : vector<16x1xf32>
    %74 = vector.broadcast %73 : vector<16x1xf32> to vector<16x32xf32>
    %75 = arith.subf %69, %74 : vector<16x32xf32>
    %76 = arith.mulf %75, %75 : vector<16x32xf32>
    %cst_19 = arith.constant dense<0.000000e+00> : vector<16xf32>
    %77 = vector.multi_reduction <add>, %76, %cst_19 [1] : vector<16x32xf32> to vector<16xf32>
    %78 = vector.shape_cast %77 : vector<16xf32> to vector<16x1xf32>
    %cst_20 = arith.constant 3.200000e+01 : f32
    %79 = vector.broadcast %cst_20 : f32 to vector<16x1xf32>
    %80 = arith.divf %78, %79 : vector<16x1xf32>
    %cst_21 = arith.constant 9.99999997E-7 : f32
    %81 = vector.broadcast %cst_21 : f32 to vector<16x1xf32>
    %82 = arith.addf %80, %81 : vector<16x1xf32>
    %83 = math.rsqrt %82 : vector<16x1xf32>
    %84 = vector.broadcast %83 : vector<16x1xf32> to vector<16x32xf32>
    %85 = arith.mulf %75, %84 : vector<16x32xf32>
    %86 = arith.truncf %85 : vector<16x32xf32> to vector<16x32xbf16>
    %c0_22 = arith.constant 0 : index
    %c0_23 = arith.constant 0 : index
    %87 = vector.load %arg3[%c0_22, %c0_23] : memref<32x64xbf16, #tpu.memory_space<vmem>>, vector<32x64xbf16>
    %cst_24 = arith.constant dense<0.000000e+00> : vector<16x64xf32>
    %88 = tpu.matmul %86, %87, %cst_24 {dimension_numbers = #tpu.dot_dimension_numbers<[1], [0], [0], [1], [0, 0, 1, 1], [], []>} : vector<16x32xbf16>, vector<32x64xbf16>, vector<16x64xf32> -> vector<16x64xf32>
    %89 = vector.broadcast %4 : vector<1x64xf32> to vector<16x64xf32>
    %90 = arith.addf %88, %89 : vector<16x64xf32>
    %cst_25 = arith.constant 5.000000e-01 : f32
    %91 = vector.broadcast %cst_25 : f32 to vector<16x64xf32>
    %92 = arith.mulf %91, %90 : vector<16x64xf32>
    %cst_26 = arith.constant 4.471500e-02 : f32
    %93 = vector.broadcast %cst_26 : f32 to vector<16x64xf32>
    %94 = arith.mulf %93, %90 : vector<16x64xf32>
    %95 = arith.mulf %94, %90 : vector<16x64xf32>
    %96 = arith.mulf %95, %90 : vector<16x64xf32>
    %97 = arith.addf %90, %96 : vector<16x64xf32>
    %cst_27 = arith.constant 0.797884583 : f32
    %98 = vector.broadcast %cst_27 : f32 to vector<16x64xf32>
    %99 = arith.mulf %98, %97 : vector<16x64xf32>
    %100 = math.tanh %99 : vector<16x64xf32>
    %cst_28 = arith.constant 1.000000e+00 : f32
    %101 = vector.broadcast %cst_28 : f32 to vector<16x64xf32>
    %102 = arith.addf %101, %100 : vector<16x64xf32>
    %103 = arith.mulf %92, %102 : vector<16x64xf32>
    %104 = arith.truncf %103 : vector<16x64xf32> to vector<16x64xbf16>
    %c0_29 = arith.constant 0 : index
    %c0_30 = arith.constant 0 : index
    %105 = vector.load %arg4[%c0_29, %c0_30] : memref<64x32xbf16, #tpu.memory_space<vmem>>, vector<64x32xbf16>
    %cst_31 = arith.constant dense<0.000000e+00> : vector<16x32xf32>
    %106 = tpu.matmul %104, %105, %cst_31 {dimension_numbers = #tpu.dot_dimension_numbers<[1], [0], [0], [1], [0, 0, 1, 1], [], []>} : vector<16x64xbf16>, vector<64x32xbf16>, vector<16x32xf32> -> vector<16x32xf32>
    %107 = vector.broadcast %5 : vector<1x32xf32> to vector<16x32xf32>
    %108 = arith.addf %106, %107 : vector<16x32xf32>
    %cst_32 = arith.constant 5.000000e-01 : f32
    %109 = vector.broadcast %cst_32 : f32 to vector<16x32xf32>
    %110 = arith.mulf %109, %108 : vector<16x32xf32>
    %cst_33 = arith.constant 4.471500e-02 : f32
    %111 = vector.broadcast %cst_33 : f32 to vector<16x32xf32>
    %112 = arith.mulf %111, %108 : vector<16x32xf32>
    %113 = arith.mulf %112, %108 : vector<16x32xf32>
    %114 = arith.mulf %113, %108 : vector<16x32xf32>
    %115 = arith.addf %108, %114 : vector<16x32xf32>
    %cst_34 = arith.constant 0.797884583 : f32
    %116 = vector.broadcast %cst_34 : f32 to vector<16x32xf32>
    %117 = arith.mulf %116, %115 : vector<16x32xf32>
    %118 = math.tanh %117 : vector<16x32xf32>
    %cst_35 = arith.constant 1.000000e+00 : f32
    %119 = vector.broadcast %cst_35 : f32 to vector<16x32xf32>
    %120 = arith.addf %119, %118 : vector<16x32xf32>
    %121 = arith.mulf %110, %120 : vector<16x32xf32>
    %122 = arith.addf %121, %69 : vector<16x32xf32>
    %c0_36 = arith.constant 0 : index
    %c0_37 = arith.constant 0 : index
    %123 = vector.load %arg6[%c0_36, %c0_37] : memref<16x32xf32, #tpu.memory_space<vmem>>, vector<16x32xf32>
    tpu.vector_store %arg6[%c0_36, %c0_37], %122 {strides = array<i32>} : memref<16x32xf32, #tpu.memory_space<vmem>>, vector<16x32xf32>,
    return
  }
}

</mosaic_0001>

<llo_original>
// kernel: tpu_custom_call.1
$region0: #{tpu_custom_call.1}
  #allocation0 [shape = 'u32[]', space=smem, size = 0x4, offset = 0x4, fixed_abs, tag = 'smem constant byte address 0x4 - core index']
  #allocation1 [shape = 'u32[72,128]{1,0:T(1,128)}', space=vmem, size = 0x9000, scoped, tag = 'internal scratch']
  %s0 = inlined_call_operand.vmem [shape: f32[16,32], index: 0, kind: input, shape index: {}]
  %s1 = inlined_call_operand.vmem [shape: bf16[32,96], index: 1, kind: input, shape index: {}]
  %s2 = inlined_call_operand.vmem [shape: bf16[32,32], index: 2, kind: input, shape index: {}]
  %s3 = inlined_call_operand.hbm [shape: bf16[32,64], index: 3, kind: input, shape index: {}]
  %s4 = inlined_call_operand.vmem [shape: bf16[64,32], index: 4, kind: input, shape index: {}]
  %s5 = inlined_call_operand.vmem [shape: f32[4,96], index: 5, kind: input, shape index: {}]
  %s6 = inlined_call_operand.hbm [shape: f32[16,32], index: 6, kind: output, shape index: {}]
  %s7 = sld [smem:[#allocation0]]
  $region38: #{tpu_custom_call.1} parent=0
    _
  %s9 = ssub.s32 1, %s7
  %s10 = scalar_select 0, %s9, %s7
  $region1: #{tpu_custom_call.1} parent=0
    #allocation2 [shape = 'u8[8192]{0}', space=vmem, size = 0x2000, scoped, tag = 'input window, operand 3, single buffered']
    #allocation3 [shape = 's32[1]{0}', space=sflag, size = 0x4, scoped, tag = 'scoped memory for tpu_custom_call.1']
    #allocation4 [shape = 's32[1]{0}', space=sflag, size = 0x4, scoped, tag = 'scoped memory for tpu_custom_call.1']
    #allocation5 [shape = 'u8[8192]{0}', space=vmem, size = 0x2000, scoped, tag = 'output window, operand 0, single buffered']
    %11 = vsyncpa [#allocation3], 0
    %12 = vsyncpa [#allocation4], 0
    // Predicated region
    $region2: #{tpu_custom_call.1} parent=1 // pred_check
      _
    $region3: #{tpu_custom_call.1} parent=1 // pred_check_branch
      %14 = sbr.rel (0) target = $region5
    $region4: #{tpu_custom_call.1} parent=1 // pred_region
      _
    $region5: #{tpu_custom_call.1} parent=1 // pred_fallthru
      _
    // Predicated region
    $region6: #{tpu_custom_call.1} parent=1 // pred_check
      _
    $region7: #{tpu_custom_call.1} parent=1 // pred_check_branch
      %16 = sbr.rel (0) target = $region9
    $region8: #{tpu_custom_call.1} parent=1 // pred_region
      _
    $region9: #{tpu_custom_call.1} parent=1 // pred_fallthru
      _
    // Predicated region
    $region10: #{tpu_custom_call.1} parent=1 // pred_check
      _
    $region11: #{tpu_custom_call.1} parent=1 // pred_check_branch
      %18 = sbr.rel (0) target = $region13
    $region12: #{tpu_custom_call.1} parent=1 // pred_region
      _
    $region13: #{tpu_custom_call.1} parent=1 // pred_fallthru
      _
    // Predicated region
    $region14: #{tpu_custom_call.1} parent=1 // pred_check
      _
    $region15: #{tpu_custom_call.1} parent=1 // pred_check_branch
      %20 = sbr.rel (0) target = $region17
    $region16: #{tpu_custom_call.1} parent=1 // pred_region
      %22 = vsyncadd [#allocation3], 0
      %s23 = sshll.u32 %s3, 4
      %s24 = int_to_ptr.hbm [resolvable:$true] %s23
      %s25 = sshll.u32 [#allocation2], 4
      %s26 = int_to_ptr.vmem [resolvable:$true] %s25
      %31 = dma.hbm_to_vmem [thread:$0]  %s24, 256, %s26, [#allocation3], 64, 64, 4
    $region17: #{tpu_custom_call.1} parent=1 // pred_fallthru
      _
    // Predicated region
    $region18: #{tpu_custom_call.1} parent=1 // pred_check
      _
    $region19: #{tpu_custom_call.1} parent=1 // pred_check_branch
      %33 = sbr.rel (0) target = $region21
    $region20: #{tpu_custom_call.1} parent=1 // pred_region
      _
    $region21: #{tpu_custom_call.1} parent=1 // pred_fallthru
      _
    // Predicated region
    $region22: #{tpu_custom_call.1} parent=1 // pred_check
      _
    $region23: #{tpu_custom_call.1} parent=1 // pred_check_branch
      %35 = sbr.rel (0) target = $region25
    $region24: #{tpu_custom_call.1} parent=1 // pred_region
      _
    $region25: #{tpu_custom_call.1} parent=1 // pred_fallthru
      _
    // Predicated region
    $region26: #{tpu_custom_call.1} parent=1 // pred_check
      _
    $region27: #{tpu_custom_call.1} parent=1 // pred_check_branch
      %37 = sbr.rel (0) target = $region29
    $region28: #{tpu_custom_call.1} parent=1 // pred_region
      %39 = dma.done [#allocation3], 256
    $region29: #{tpu_custom_call.1} parent=1 // pred_fallthru
      _
    %v41 = vld [vmem:[%s0] sm:$0xff]
    %v42 = vld [vmem:[%s0 + $0x8] sm:$0xff]
    %v43 = vld [vmem:[%s5] sm:$0xf]
    %vm44 = vcmask 261120
    %v45 = vsel %vm44, %v41, 0.0
    %46 = vadd.xlane.f32.xlu0 %v45
    %v47 = vpop.xlane.xlu0 %46
    %v48 = vsel %vm44, %v42, 0.0
    %49 = vadd.xlane.f32.xlu0 %v48
    %v50 = vpop.xlane.xlu0 %49
    %v51 = vrcp.pop 32.0
    %v52 = vmul.f32 32.0, %v51
    %v53 = vsub.f32 1.0, %v52
    %v54 = vmul.f32 %v51, %v53
    %v55 = vadd.f32 %v51, %v54
    %vm56 = vweird.f32 %v51
    %v57 = vsel %vm56, %v51, %v55
    %v58 = vmul.f32 %v47, %v57
    %v59 = vmul.f32 %v50, %v57
    %v60 = vsub.f32 %v41, %v58
    %v61 = vsub.f32 %v42, %v59
    %v62 = vmul.f32 %v60, %v60
    %v63 = vmul.f32 %v61, %v61
    %v64 = vsel %vm44, %v62, 0.0
    %65 = vadd.xlane.f32.xlu0 %v64
    %v66 = vpop.xlane.xlu0 %65
    %v67 = vsel %vm44, %v63, 0.0
    %68 = vadd.xlane.f32.xlu0 %v67
    %v69 = vpop.xlane.xlu0 %68
    %v70 = vmul.f32 %v66, %v57
    %v71 = vmul.f32 %v69, %v57
    %v72 = vadd.f32 %v70, 1e-06
    %v73 = vadd.f32 %v71, 1e-06
    %v74 = vrsqrt.pop %v72
    %v75 = vmul.f32 %v74, %v72
    %v76 = vmul.f32 %v75, %v74
    %v77 = vmul.f32 0.5, %v76
    %v78 = vsub.f32 1.5, %v77
    %v79 = vmul.f32 %v74, %v78
    %vm80 = vweird.f32 %v72
    %vm81 = vweird.f32 %v74
    %vm82 = vmor %vm80, %vm81
    %v83 = vsel %vm82, %v74, %v79
    %v84 = vrsqrt.pop %v73
    %v85 = vmul.f32 %v84, %v73
    %v86 = vmul.f32 %v85, %v84
    %v87 = vmul.f32 0.5, %v86
    %v88 = vsub.f32 1.5, %v87
    %v89 = vmul.f32 %v84, %v88
    %vm90 = vweird.f32 %v73
    %vm91 = vweird.f32 %v84
    %vm92 = vmor %vm90, %vm91
    %v93 = vsel %vm92, %v84, %v89
    %v94 = vmul.f32 %v60, %v83
    %v95 = vmul.f32 %v61, %v93
    %v96 = vpack.c.bf16 %v95, %v94
    %v97 = vld [vmem:[%s1] sm:$0xf]
    %v98 = vld [vmem:[%s1 + $0x4] sm:$0xf]
    %v99 = vld [vmem:[%s1 + $0x8] sm:$0xf]
    %v100 = vld [vmem:[%s1 + $0xc] sm:$0xf]
    %v101 = vperm.slane %v43, 0
    %v106 = vunpack.c.l.b16 %v97
    %v107 = vunpack.c.l.b16 %v98
    %v108 = vunpack.c.l.b16 %v99
    %v109 = vunpack.c.l.b16 %v100
    %v110 = vpack.c.b16 %v107, %v106
    %v111 = vpack.c.b16 %v109, %v108
    %v115 = vsel %vm44, %v96, 0
    %117 = vmatpush.bf16.msra.mxu0 0
    %118 = vmatpush.bf16.msra.mxu0 0
    %119 = vmatpush.bf16.msra.mxu0 0
    %120 = vmatpush.bf16.msra.mxu0 0
    %121 = vmatpush.bf16.msra.mxu0 0
    %122 = vmatpush.bf16.msra.mxu0 0
    %123 = vmatpush.bf16.msra.mxu0 %v111
    %124 = vmatpush.bf16.msra.mxu0 %v110
    %125 = vmatmul.bf16.gmra.mxu0 %v115
    %v126 = vpop.f32.mrf.mxu0
    %v127 = vadd.f32 %v101, %v126
    %v128 = vpop.f32.mrf.mxu0
    %v129 = vadd.f32 %v101, %v128
    %130 = vdwg.mxu0
    %133 = vrot.lane.b32.xlu0 %v127, 120
    %v134 = vpop.permute.xlu0 %133
    %135 = vrot.lane.b32.xlu0 %v129, 120
    %v136 = vpop.permute.xlu0 %135
    %139 = vrot.lane.b32.xlu0 %v127, 112
    %v140 = vpop.permute.xlu0 %139
    %141 = vrot.lane.b32.xlu0 %v129, 112
    %v142 = vpop.permute.xlu0 %141
    %145 = vrot.lane.b32.xlu0 %v127, 104
    %v146 = vpop.permute.xlu0 %145
    %147 = vrot.lane.b32.xlu0 %v129, 104
    %v148 = vpop.permute.xlu0 %147
    %v151 = vpack.c.bf16 %v127, %v127
    %v152 = vpack.c.bf16 %v129, %v129
    %v153 = vpack.c.bf16 %v134, %v134
    %v154 = vpack.c.bf16 %v136, %v136
    %v155 = vpack.c.bf16 %v140, %v140
    %v156 = vpack.c.bf16 %v142, %v142
    %v157 = vpack.c.bf16 %v146, %v146
    %v158 = vpack.c.bf16 %v148, %v148
    %v160 = vunpack.c.l.b16 %v151
    %v161 = vpack.c.b16 %v160, %v160
    %162 = vrot.lane.b32.xlu0 %v161, 96
    %v163 = vpop.permute.xlu0 %162
    %vm164 = vcmask 64512
    %v166 = vsel %vm164, %v151, 0
    %v169 = vsel %vm164, %v163, 0
    %171 = vmatpush.bf16.xpose.msra.mxu0 0
    %172 = vmatpush.bf16.xpose.msra.mxu0 0
    %173 = vmatpush.bf16.xpose.msra.mxu0 0
    %174 = vmatpush.bf16.xpose.msra.mxu0 0
    %175 = vmatpush.bf16.xpose.msra.mxu0 0
    %176 = vmatpush.bf16.xpose.msra.mxu0 0
    %177 = vmatpush.bf16.xpose.msra.mxu0 0
    %178 = vmatpush.bf16.xpose.msra.mxu0 %v169
    %179 = vmatmul.bf16.gmra.mxu0 %v166
    %v180 = vpop.f32.mrf.mxu0
    %v181 = vadd.f32 0.0, %v180
    %v182 = vpop.f32.mrf.mxu0
    %183 = vdwg.mxu0
    %v185 = vunpack.c.l.b16 %v152
    %v186 = vpack.c.b16 %v185, %v185
    %187 = vrot.lane.b32.xlu0 %v186, 96
    %v188 = vpop.permute.xlu0 %187
    %v190 = vsel %vm164, %v152, 0
    %v193 = vsel %vm164, %v188, 0
    %195 = vmatpush.bf16.xpose.msra.mxu0 0
    %196 = vmatpush.bf16.xpose.msra.mxu0 0
    %197 = vmatpush.bf16.xpose.msra.mxu0 0
    %198 = vmatpush.bf16.xpose.msra.mxu0 0
    %199 = vmatpush.bf16.xpose.msra.mxu0 0
    %200 = vmatpush.bf16.xpose.msra.mxu0 0
    %201 = vmatpush.bf16.xpose.msra.mxu0 0
    %202 = vmatpush.bf16.xpose.msra.mxu0 %v193
    %203 = vmatmul.bf16.gmra.mxu0 %v190
    %v204 = vpop.f32.mrf.mxu0
    %v205 = vadd.f32 0.0, %v204
    %v206 = vpop.f32.mrf.mxu0
    %207 = vdwg.mxu0
    %v209 = vunpack.c.l.b16 %v153
    %v210 = vpack.c.b16 %v209, %v209
    %211 = vrot.lane.b32.xlu0 %v210, 96
    %v212 = vpop.permute.xlu0 %211
    %v214 = vsel %vm164, %v153, 0
    %v217 = vsel %vm164, %v212, 0
    %219 = vmatpush.bf16.xpose.msra.mxu0 0
    %220 = vmatpush.bf16.xpose.msra.mxu0 0
    %221 = vmatpush.bf16.xpose.msra.mxu0 0
    %222 = vmatpush.bf16.xpose.msra.mxu0 0
    %223 = vmatpush.bf16.xpose.msra.mxu0 0
    %224 = vmatpush.bf16.xpose.msra.mxu0 0
    %225 = vmatpush.bf16.xpose.msra.mxu0 0
    %226 = vmatpush.bf16.xpose.msra.mxu0 %v217
    %227 = vmatmul.bf16.gmra.mxu0 %v214
    %v228 = vpop.f32.mrf.mxu0
    %v229 = vadd.f32 0.0, %v228
    %v230 = vpop.f32.mrf.mxu0
    %231 = vdwg.mxu0
    %v233 = vunpack.c.l.b16 %v154
    %v234 = vpack.c.b16 %v233, %v233
    %235 = vrot.lane.b32.xlu0 %v234, 96
    %v236 = vpop.permute.xlu0 %235
    %v238 = vsel %vm164, %v154, 0
    %v241 = vsel %vm164, %v236, 0
    %243 = vmatpush.bf16.xpose.msra.mxu0 0
    %244 = vmatpush.bf16.xpose.msra.mxu0 0
    %245 = vmatpush.bf16.xpose.msra.mxu0 0
    %246 = vmatpush.bf16.xpose.msra.mxu0 0
    %247 = vmatpush.bf16.xpose.msra.mxu0 0
    %248 = vmatpush.bf16.xpose.msra.mxu0 0
    %249 = vmatpush.bf16.xpose.msra.mxu0 0
    %250 = vmatpush.bf16.xpose.msra.mxu0 %v241
    %251 = vmatmul.bf16.gmra.mxu0 %v238
    %v252 = vpop.f32.mrf.mxu0
    %v253 = vadd.f32 0.0, %v252
    %v254 = vpop.f32.mrf.mxu0
    %255 = vdwg.mxu0
    %v257 = vunpack.c.l.b16 %v155
    %v258 = vpack.c.b16 %v257, %v257
    %259 = vrot.lane.b32.xlu0 %v258, 96
    %v260 = vpop.permute.xlu0 %259
    %v262 = vsel %vm164, %v155, 0
    %v265 = vsel %vm164, %v260, 0
    %267 = vmatpush.bf16.xpose.msra.mxu0 0
    %268 = vmatpush.bf16.xpose.msra.mxu0 0
    %269 = vmatpush.bf16.xpose.msra.mxu0 0
    %270 = vmatpush.bf16.xpose.msra.mxu0 0
    %271 = vmatpush.bf16.xpose.msra.mxu0 0
    %272 = vmatpush.bf16.xpose.msra.mxu0 0
    %273 = vmatpush.bf16.xpose.msra.mxu0 0
    %274 = vmatpush.bf16.xpose.msra.mxu0 %v265
    %275 = vmatmul.bf16.gmra.mxu0 %v262
    %v276 = vpop.f32.mrf.mxu0
    %v277 = vadd.f32 0.0, %v276
    %v278 = vpop.f32.mrf.mxu0
    %279 = vdwg.mxu0
    %v281 = vunpack.c.l.b16 %v156
    %v282 = vpack.c.b16 %v281, %v281
    %283 = vrot.lane.b32.xlu0 %v282, 96
    %v284 = vpop.permute.xlu0 %283
    %v286 = vsel %vm164, %v156, 0
    %v289 = vsel %vm164, %v284, 0
    %291 = vmatpush.bf16.xpose.msra.mxu0 0
    %292 = vmatpush.bf16.xpose.msra.mxu0 0
    %293 = vmatpush.bf16.xpose.msra.mxu0 0
    %294 = vmatpush.bf16.xpose.msra.mxu0 0
    %295 = vmatpush.bf16.xpose.msra.mxu0 0
    %296 = vmatpush.bf16.xpose.msra.mxu0 0
    %297 = vmatpush.bf16.xpose.msra.mxu0 0
    %298 = vmatpush.bf16.xpose.msra.mxu0 %v289
    %299 = vmatmul.bf16.gmra.mxu0 %v286
    %v300 = vpop.f32.mrf.mxu0
    %v301 = vadd.f32 0.0, %v300
    %v302 = vpop.f32.mrf.mxu0
    %303 = vdwg.mxu0
    %v305 = vunpack.c.l.b16 %v157
    %v306 = vpack.c.b16 %v305, %v305
    %307 = vrot.lane.b32.xlu0 %v306, 96
    %v308 = vpop.permute.xlu0 %307
    %v310 = vsel %vm164, %v157, 0
    %v313 = vsel %vm164, %v308, 0
    %315 = vmatpush.bf16.xpose.msra.mxu0 0
    %316 = vmatpush.bf16.xpose.msra.mxu0 0
    %317 = vmatpush.bf16.xpose.msra.mxu0 0
    %318 = vmatpush.bf16.xpose.msra.mxu0 0
    %319 = vmatpush.bf16.xpose.msra.mxu0 0
    %320 = vmatpush.bf16.xpose.msra.mxu0 0
    %321 = vmatpush.bf16.xpose.msra.mxu0 0
    %322 = vmatpush.bf16.xpose.msra.mxu0 %v313
    %323 = vmatmul.bf16.gmra.mxu0 %v310
    %v324 = vpop.f32.mrf.mxu0
    %v325 = vadd.f32 0.0, %v324
    %v326 = vpop.f32.mrf.mxu0
    %327 = vdwg.mxu0
    %v329 = vunpack.c.l.b16 %v158
    %v330 = vpack.c.b16 %v329, %v329
    %331 = vrot.lane.b32.xlu0 %v330, 96
    %v332 = vpop.permute.xlu0 %331
    %v334 = vsel %vm164, %v158, 0
    %v337 = vsel %vm164, %v332, 0
    %339 = vmatpush.bf16.xpose.msra.mxu0 0
    %340 = vmatpush.bf16.xpose.msra.mxu0 0
    %341 = vmatpush.bf16.xpose.msra.mxu0 0
    %342 = vmatpush.bf16.xpose.msra.mxu0 0
    %343 = vmatpush.bf16.xpose.msra.mxu0 0
    %344 = vmatpush.bf16.xpose.msra.mxu0 0
    %345 = vmatpush.bf16.xpose.msra.mxu0 0
    %346 = vmatpush.bf16.xpose.msra.mxu0 %v337
    %347 = vmatmul.bf16.gmra.mxu0 %v334
    %v348 = vpop.f32.mrf.mxu0
    %v349 = vadd.f32 0.0, %v348
    %v350 = vpop.f32.mrf.mxu0
    %351 = vdwg.mxu0
    %v352 = vsel %vm164, %v181, -inf
    %353 = vmax.xlane.f32.xlu0 %v352
    %v354 = vpop.xlane.xlu0 %353
    %v355 = vsel %vm164, %v205, -inf
    %356 = vmax.xlane.f32.xlu0 %v355
    %v357 = vpop.xlane.xlu0 %356
    %v358 = vsel %vm164, %v229, -inf
    %359 = vmax.xlane.f32.xlu0 %v358
    %v360 = vpop.xlane.xlu0 %359
    %v361 = vsel %vm164, %v253, -inf
    %362 = vmax.xlane.f32.xlu0 %v361
    %v363 = vpop.xlane.xlu0 %362
    %v364 = vsel %vm164, %v277, -inf
    %365 = vmax.xlane.f32.xlu0 %v364
    %v366 = vpop.xlane.xlu0 %365
    %v367 = vsel %vm164, %v301, -inf
    %368 = vmax.xlane.f32.xlu0 %v367
    %v369 = vpop.xlane.xlu0 %368
    %v370 = vsel %vm164, %v325, -inf
    %371 = vmax.xlane.f32.xlu0 %v370
    %v372 = vpop.xlane.xlu0 %371
    %v373 = vsel %vm164, %v349, -inf
    %374 = vmax.xlane.f32.xlu0 %v373
    %v375 = vpop.xlane.xlu0 %374
    %v376 = vsub.f32 %v181, %v354
    %v377 = vsub.f32 %v205, %v357
    %v378 = vsub.f32 %v229, %v360
    %v379 = vsub.f32 %v253, %v363
    %v380 = vsub.f32 %v277, %v366
    %v381 = vsub.f32 %v301, %v369
    %v382 = vsub.f32 %v325, %v372
    %v383 = vsub.f32 %v349, %v375
    %v384 = vmul.f32 %v376, 1.442695
    %v385 = vpow.pop %v384
    %v386 = vmul.f32 %v377, 1.442695
    %v387 = vpow.pop %v386
    %v388 = vmul.f32 %v378, 1.442695
    %v389 = vpow.pop %v388
    %v390 = vmul.f32 %v379, 1.442695
    %v391 = vpow.pop %v390
    %v392 = vmul.f32 %v380, 1.442695
    %v393 = vpow.pop %v392
    %v394 = vmul.f32 %v381, 1.442695
    %v395 = vpow.pop %v394
    %v396 = vmul.f32 %v382, 1.442695
    %v397 = vpow.pop %v396
    %v398 = vmul.f32 %v383, 1.442695
    %v399 = vpow.pop %v398
    %v400 = vsel %vm164, %v385, 0.0
    %401 = vadd.xlane.f32.xlu0 %v400
    %v402 = vpop.xlane.xlu0 %401
    %v403 = vsel %vm164, %v387, 0.0
    %404 = vadd.xlane.f32.xlu0 %v403
    %v405 = vpop.xlane.xlu0 %404
    %v406 = vsel %vm164, %v389, 0.0
    %407 = vadd.xlane.f32.xlu0 %v406
    %v408 = vpop.xlane.xlu0 %407
    %v409 = vsel %vm164, %v391, 0.0
    %410 = vadd.xlane.f32.xlu0 %v409
    %v411 = vpop.xlane.xlu0 %410
    %v412 = vsel %vm164, %v393, 0.0
    %413 = vadd.xlane.f32.xlu0 %v412
    %v414 = vpop.xlane.xlu0 %413
    %v415 = vsel %vm164, %v395, 0.0
    %416 = vadd.xlane.f32.xlu0 %v415
    %v417 = vpop.xlane.xlu0 %416
    %v418 = vsel %vm164, %v397, 0.0
    %419 = vadd.xlane.f32.xlu0 %v418
    %v420 = vpop.xlane.xlu0 %419
    %v421 = vsel %vm164, %v399, 0.0
    %422 = vadd.xlane.f32.xlu0 %v421
    %v423 = vpop.xlane.xlu0 %422
    %v424 = vrcp.pop %v402
    %v425 = vmul.f32 %v402, %v424
    %v426 = vsub.f32 1.0, %v425
    %v427 = vmul.f32 %v424, %v426
    %v428 = vadd.f32 %v424, %v427
    %vm429 = vweird.f32 %v402
    %vm430 = vweird.f32 %v424
    %vm431 = vmor %vm429, %vm430
    %v432 = vsel %vm431, %v424, %v428
    %v433 = vand.u32 2147483647, %v402
    %vm434 = vcmp.eq.f32.partialorder %v433, 8.507059e+37
    %v435 = vand.u32 %v402, 2147483648
    %v436 = vor.u32 1.1754944e-38, %v435
    %v437 = vsel %vm434, %v436, %v432
    %v438 = vmul.f32 %v385, %v437
    %v439 = vrcp.pop %v405
    %v440 = vmul.f32 %v405, %v439
    %v441 = vsub.f32 1.0, %v440
    %v442 = vmul.f32 %v439, %v441
    %v443 = vadd.f32 %v439, %v442
    %vm444 = vweird.f32 %v405
    %vm445 = vweird.f32 %v439
    %vm446 = vmor %vm444, %vm445
    %v447 = vsel %vm446, %v439, %v443
    %v448 = vand.u32 2147483647, %v405
    %vm449 = vcmp.eq.f32.partialorder %v448, 8.507059e+37
    %v450 = vand.u32 %v405, 2147483648
    %v451 = vor.u32 1.1754944e-38, %v450
    %v452 = vsel %vm449, %v451, %v447
    %v453 = vmul.f32 %v387, %v452
    %v454 = vrcp.pop %v408
    %v455 = vmul.f32 %v408, %v454
    %v456 = vsub.f32 1.0, %v455
    %v457 = vmul.f32 %v454, %v456
    %v458 = vadd.f32 %v454, %v457
    %vm459 = vweird.f32 %v408
    %vm460 = vweird.f32 %v454
    %vm461 = vmor %vm459, %vm460
    %v462 = vsel %vm461, %v454, %v458
    %v463 = vand.u32 2147483647, %v408
    %vm464 = vcmp.eq.f32.partialorder %v463, 8.507059e+37
    %v465 = vand.u32 %v408, 2147483648
    %v466 = vor.u32 1.1754944e-38, %v465
    %v467 = vsel %vm464, %v466, %v462
    %v468 = vmul.f32 %v389, %v467
    %v469 = vrcp.pop %v411
    %v470 = vmul.f32 %v411, %v469
    %v471 = vsub.f32 1.0, %v470
    %v472 = vmul.f32 %v469, %v471
    %v473 = vadd.f32 %v469, %v472
    %vm474 = vweird.f32 %v411
    %vm475 = vweird.f32 %v469
    %vm476 = vmor %vm474, %vm475
    %v477 = vsel %vm476, %v469, %v473
    %v478 = vand.u32 2147483647, %v411
    %vm479 = vcmp.eq.f32.partialorder %v478, 8.507059e+37
    %v480 = vand.u32 %v411, 2147483648
    %v481 = vor.u32 1.1754944e-38, %v480
    %v482 = vsel %vm479, %v481, %v477
    %v483 = vmul.f32 %v391, %v482
    %v484 = vrcp.pop %v414
    %v485 = vmul.f32 %v414, %v484
    %v486 = vsub.f32 1.0, %v485
    %v487 = vmul.f32 %v484, %v486
    %v488 = vadd.f32 %v484, %v487
    %vm489 = vweird.f32 %v414
    %vm490 = vweird.f32 %v484
    %vm491 = vmor %vm489, %vm490
    %v492 = vsel %vm491, %v484, %v488
    %v493 = vand.u32 2147483647, %v414
    %vm494 = vcmp.eq.f32.partialorder %v493, 8.507059e+37
    %v495 = vand.u32 %v414, 2147483648
    %v496 = vor.u32 1.1754944e-38, %v495
    %v497 = vsel %vm494, %v496, %v492
    %v498 = vmul.f32 %v393, %v497
    %v499 = vrcp.pop %v417
    %v500 = vmul.f32 %v417, %v499
    %v501 = vsub.f32 1.0, %v500
    %v502 = vmul.f32 %v499, %v501
    %v503 = vadd.f32 %v499, %v502
    %vm504 = vweird.f32 %v417
    %vm505 = vweird.f32 %v499
    %vm506 = vmor %vm504, %vm505
    %v507 = vsel %vm506, %v499, %v503
    %v508 = vand.u32 2147483647, %v417
    %vm509 = vcmp.eq.f32.partialorder %v508, 8.507059e+37
    %v510 = vand.u32 %v417, 2147483648
    %v511 = vor.u32 1.1754944e-38, %v510
    %v512 = vsel %vm509, %v511, %v507
    %v513 = vmul.f32 %v395, %v512
    %v514 = vrcp.pop %v420
    %v515 = vmul.f32 %v420, %v514
    %v516 = vsub.f32 1.0, %v515
    %v517 = vmul.f32 %v514, %v516
    %v518 = vadd.f32 %v514, %v517
    %vm519 = vweird.f32 %v420
    %vm520 = vweird.f32 %v514
    %vm521 = vmor %vm519, %vm520
    %v522 = vsel %vm521, %v514, %v518
    %v523 = vand.u32 2147483647, %v420
    %vm524 = vcmp.eq.f32.partialorder %v523, 8.507059e+37
    %v525 = vand.u32 %v420, 2147483648
    %v526 = vor.u32 1.1754944e-38, %v525
    %v527 = vsel %vm524, %v526, %v522
    %v528 = vmul.f32 %v397, %v527
    %v529 = vrcp.pop %v423
    %v530 = vmul.f32 %v423, %v529
    %v531 = vsub.f32 1.0, %v530
    %v532 = vmul.f32 %v529, %v531
    %v533 = vadd.f32 %v529, %v532
    %vm534 = vweird.f32 %v423
    %vm535 = vweird.f32 %v529
    %vm536 = vmor %vm534, %vm535
    %v537 = vsel %vm536, %v529, %v533
    %v538 = vand.u32 2147483647, %v423
    %vm539 = vcmp.eq.f32.partialorder %v538, 8.507059e+37
    %v540 = vand.u32 %v423, 2147483648
    %v541 = vor.u32 1.1754944e-38, %v540
    %v542 = vsel %vm539, %v541, %v537
    %v543 = vmul.f32 %v399, %v542
    %v544 = vpack.c.bf16 %v438, %v438
    %v545 = vpack.c.bf16 %v453, %v453
    %v546 = vpack.c.bf16 %v468, %v468
    %v547 = vpack.c.bf16 %v483, %v483
    %v548 = vpack.c.bf16 %v498, %v498
    %v549 = vpack.c.bf16 %v513, %v513
    %v550 = vpack.c.bf16 %v528, %v528
    %v551 = vpack.c.bf16 %v543, %v543
    %552 = vrot.lane.b32.xlu0 %v161, 64
    %v553 = vpop.permute.xlu0 %552
    %v555 = vsel %vm164, %v544, 0
    %vm557 = vcmask 1043456
    %v559 = vsel %vm557, %v553, 0
    %561 = vmatpush.bf16.msra.mxu0 0
    %562 = vmatpush.bf16.msra.mxu0 0
    %563 = vmatpush.bf16.msra.mxu0 0
    %564 = vmatpush.bf16.msra.mxu0 0
    %565 = vmatpush.bf16.msra.mxu0 0
    %566 = vmatpush.bf16.msra.mxu0 0
    %567 = vmatpush.bf16.msra.mxu0 0
    %568 = vmatpush.bf16.msra.mxu0 %v559
    %569 = vmatmul.bf16.gmra.mxu0 %v555
    %v570 = vpop.f32.mrf.mxu0
    %v571 = vadd.f32 0.0, %v570
    %v572 = vpop.f32.mrf.mxu0
    %573 = vdwg.mxu0
    %574 = vrot.lane.b32.xlu0 %v186, 64
    %v575 = vpop.permute.xlu0 %574
    %v577 = vsel %vm164, %v545, 0
    %v580 = vsel %vm557, %v575, 0
    %582 = vmatpush.bf16.msra.mxu0 0
    %583 = vmatpush.bf16.msra.mxu0 0
    %584 = vmatpush.bf16.msra.mxu0 0
    %585 = vmatpush.bf16.msra.mxu0 0
    %586 = vmatpush.bf16.msra.mxu0 0
    %587 = vmatpush.bf16.msra.mxu0 0
    %588 = vmatpush.bf16.msra.mxu0 0
    %589 = vmatpush.bf16.msra.mxu0 %v580
    %590 = vmatmul.bf16.gmra.mxu0 %v577
    %v591 = vpop.f32.mrf.mxu0
    %v592 = vadd.f32 0.0, %v591
    %v593 = vpop.f32.mrf.mxu0
    %594 = vdwg.mxu0
    %595 = vrot.lane.b32.xlu0 %v210, 64
    %v596 = vpop.permute.xlu0 %595
    %v598 = vsel %vm164, %v546, 0
    %v601 = vsel %vm557, %v596, 0
    %603 = vmatpush.bf16.msra.mxu0 0
    %604 = vmatpush.bf16.msra.mxu0 0
    %605 = vmatpush.bf16.msra.mxu0 0
    %606 = vmatpush.bf16.msra.mxu0 0
    %607 = vmatpush.bf16.msra.mxu0 0
    %608 = vmatpush.bf16.msra.mxu0 0
    %609 = vmatpush.bf16.msra.mxu0 0
    %610 = vmatpush.bf16.msra.mxu0 %v601
    %611 = vmatmul.bf16.gmra.mxu0 %v598
    %v612 = vpop.f32.mrf.mxu0
    %v613 = vadd.f32 0.0, %v612
    %v614 = vpop.f32.mrf.mxu0
    %615 = vdwg.mxu0
    %616 = vrot.lane.b32.xlu0 %v234, 64
    %v617 = vpop.permute.xlu0 %616
    %v619 = vsel %vm164, %v547, 0
    %v622 = vsel %vm557, %v617, 0
    %624 = vmatpush.bf16.msra.mxu0 0
    %625 = vmatpush.bf16.msra.mxu0 0
    %626 = vmatpush.bf16.msra.mxu0 0
    %627 = vmatpush.bf16.msra.mxu0 0
    %628 = vmatpush.bf16.msra.mxu0 0
    %629 = vmatpush.bf16.msra.mxu0 0
    %630 = vmatpush.bf16.msra.mxu0 0
    %631 = vmatpush.bf16.msra.mxu0 %v622
    %632 = vmatmul.bf16.gmra.mxu0 %v619
    %v633 = vpop.f32.mrf.mxu0
    %v634 = vadd.f32 0.0, %v633
    %v635 = vpop.f32.mrf.mxu0
    %636 = vdwg.mxu0
    %637 = vrot.lane.b32.xlu0 %v258, 64
    %v638 = vpop.permute.xlu0 %637
    %v640 = vsel %vm164, %v548, 0
    %v643 = vsel %vm557, %v638, 0
    %645 = vmatpush.bf16.msra.mxu0 0
    %646 = vmatpush.bf16.msra.mxu0 0
    %647 = vmatpush.bf16.msra.mxu0 0
    %648 = vmatpush.bf16.msra.mxu0 0
    %649 = vmatpush.bf16.msra.mxu0 0
    %650 = vmatpush.bf16.msra.mxu0 0
    %651 = vmatpush.bf16.msra.mxu0 0
    %652 = vmatpush.bf16.msra.mxu0 %v643
    %653 = vmatmul.bf16.gmra.mxu0 %v640
    %v654 = vpop.f32.mrf.mxu0
    %v655 = vadd.f32 0.0, %v654
    %v656 = vpop.f32.mrf.mxu0
    %657 = vdwg.mxu0
    %658 = vrot.lane.b32.xlu0 %v282, 64
    %v659 = vpop.permute.xlu0 %658
    %v661 = vsel %vm164, %v549, 0
    %v664 = vsel %vm557, %v659, 0
    %666 = vmatpush.bf16.msra.mxu0 0
    %667 = vmatpush.bf16.msra.mxu0 0
    %668 = vmatpush.bf16.msra.mxu0 0
    %669 = vmatpush.bf16.msra.mxu0 0
    %670 = vmatpush.bf16.msra.mxu0 0
    %671 = vmatpush.bf16.msra.mxu0 0
    %672 = vmatpush.bf16.msra.mxu0 0
    %673 = vmatpush.bf16.msra.mxu0 %v664
    %674 = vmatmul.bf16.gmra.mxu0 %v661
    %v675 = vpop.f32.mrf.mxu0
    %v676 = vadd.f32 0.0, %v675
    %v677 = vpop.f32.mrf.mxu0
    %678 = vdwg.mxu0
    %679 = vrot.lane.b32.xlu0 %v306, 64
    %v680 = vpop.permute.xlu0 %679
    %v682 = vsel %vm164, %v550, 0
    %v685 = vsel %vm557, %v680, 0
    %687 = vmatpush.bf16.msra.mxu0 0
    %688 = vmatpush.bf16.msra.mxu0 0
    %689 = vmatpush.bf16.msra.mxu0 0
    %690 = vmatpush.bf16.msra.mxu0 0
    %691 = vmatpush.bf16.msra.mxu0 0
    %692 = vmatpush.bf16.msra.mxu0 0
    %693 = vmatpush.bf16.msra.mxu0 0
    %694 = vmatpush.bf16.msra.mxu0 %v685
    %695 = vmatmul.bf16.gmra.mxu0 %v682
    %v696 = vpop.f32.mrf.mxu0
    %v697 = vadd.f32 0.0, %v696
    %v698 = vpop.f32.mrf.mxu0
    %699 = vdwg.mxu0
    %700 = vrot.lane.b32.xlu0 %v330, 64
    %v701 = vpop.permute.xlu0 %700
    %v703 = vsel %vm164, %v551, 0
    %v706 = vsel %vm557, %v701, 0
    %708 = vmatpush.bf16.msra.mxu0 0
    %709 = vmatpush.bf16.msra.mxu0 0
    %710 = vmatpush.bf16.msra.mxu0 0
    %711 = vmatpush.bf16.msra.mxu0 0
    %712 = vmatpush.bf16.msra.mxu0 0
    %713 = vmatpush.bf16.msra.mxu0 0
    %714 = vmatpush.bf16.msra.mxu0 0
    %715 = vmatpush.bf16.msra.mxu0 %v706
    %716 = vmatmul.bf16.gmra.mxu0 %v703
    %v717 = vpop.f32.mrf.mxu0
    %v718 = vadd.f32 0.0, %v717
    %v719 = vpop.f32.mrf.mxu0
    %720 = vdwg.mxu0
    %723 = vrot.lane.b32.xlu0 %v613, 8
    %v724 = vpop.permute.xlu0 %723
    %725 = vrot.lane.b32.xlu0 %v634, 8
    %v726 = vpop.permute.xlu0 %725
    %731 = vrot.lane.b32.xlu0 %v655, 16
    %v732 = vpop.permute.xlu0 %731
    %733 = vrot.lane.b32.xlu0 %v676, 16
    %v734 = vpop.permute.xlu0 %733
    %739 = vrot.lane.b32.xlu0 %v697, 24
    %v740 = vpop.permute.xlu0 %739
    %741 = vrot.lane.b32.xlu0 %v718, 24
    %v742 = vpop.permute.xlu0 %741
    %v745 = vsel %vm164, %v571, %v724
    %v746 = vsel %vm164, %v592, %v726
    %vm747 = vcmask 130048
    %v748 = vsel %vm747, %v745, %v732
    %v749 = vsel %vm747, %v746, %v734
    %vm750 = vcmask 195584
    %v751 = vsel %vm750, %v748, %v740
    %v752 = vsel %vm750, %v749, %v742
    %v753 = vpack.c.bf16 %v752, %v751
    %v754 = vld [vmem:[%s2] sm:$0xf]
    %v755 = vld [vmem:[%s2 + $0x4] sm:$0xf]
    %v756 = vld [vmem:[%s2 + $0x8] sm:$0xf]
    %v757 = vld [vmem:[%s2 + $0xc] sm:$0xf]
    %v758 = vperm.slane %v43, 1
    %v763 = vunpack.c.l.b16 %v754
    %v764 = vunpack.c.l.b16 %v755
    %v765 = vunpack.c.l.b16 %v756
    %v766 = vunpack.c.l.b16 %v757
    %v767 = vpack.c.b16 %v764, %v763
    %v768 = vpack.c.b16 %v766, %v765
    %v772 = vsel %vm44, %v753, 0
    %774 = vmatpush.bf16.msra.mxu0 0
    %775 = vmatpush.bf16.msra.mxu0 0
    %776 = vmatpush.bf16.msra.mxu0 0
    %777 = vmatpush.bf16.msra.mxu0 0
    %778 = vmatpush.bf16.msra.mxu0 0
    %779 = vmatpush.bf16.msra.mxu0 0
    %780 = vmatpush.bf16.msra.mxu0 %v768
    %781 = vmatpush.bf16.msra.mxu0 %v767
    %782 = vmatmul.bf16.gmra.mxu0 %v772
    %v783 = vpop.f32.mrf.mxu0
    %v784 = vadd.f32 %v758, %v783
    %v785 = vpop.f32.mrf.mxu0
    %v786 = vadd.f32 %v758, %v785
    %787 = vdwg.mxu0
    %v788 = vadd.f32 %v784, %v41
    %v789 = vadd.f32 %v786, %v42
    %v790 = vsel %vm44, %v788, 0.0
    %791 = vadd.xlane.f32.xlu0 %v790
    %v792 = vpop.xlane.xlu0 %791
    %v793 = vsel %vm44, %v789, 0.0
    %794 = vadd.xlane.f32.xlu0 %v793
    %v795 = vpop.xlane.xlu0 %794
    %v796 = vmul.f32 %v792, %v57
    %v797 = vmul.f32 %v795, %v57
    %v798 = vsub.f32 %v788, %v796
    %v799 = vsub.f32 %v789, %v797
    %v800 = vmul.f32 %v798, %v798
    %v801 = vmul.f32 %v799, %v799
    %v802 = vsel %vm44, %v800, 0.0
    %803 = vadd.xlane.f32.xlu0 %v802
    %v804 = vpop.xlane.xlu0 %803
    %v805 = vsel %vm44, %v801, 0.0
    %806 = vadd.xlane.f32.xlu0 %v805
    %v807 = vpop.xlane.xlu0 %806
    %v808 = vmul.f32 %v804, %v57
    %v809 = vmul.f32 %v807, %v57
    %v810 = vadd.f32 %v808, 1e-06
    %v811 = vadd.f32 %v809, 1e-06
    %v812 = vrsqrt.pop %v810
    %v813 = vmul.f32 %v812, %v810
    %v814 = vmul.f32 %v813, %v812
    %v815 = vmul.f32 0.5, %v814
    %v816 = vsub.f32 1.5, %v815
    %v817 = vmul.f32 %v812, %v816
    %vm818 = vweird.f32 %v810
    %vm819 = vweird.f32 %v812
    %vm820 = vmor %vm818, %vm819
    %v821 = vsel %vm820, %v812, %v817
    %v822 = vrsqrt.pop %v811
    %v823 = vmul.f32 %v822, %v811
    %v824 = vmul.f32 %v823, %v822
    %v825 = vmul.f32 0.5, %v824
    %v826 = vsub.f32 1.5, %v825
    %v827 = vmul.f32 %v822, %v826
    %vm828 = vweird.f32 %v811
    %vm829 = vweird.f32 %v822
    %vm830 = vmor %vm828, %vm829
    %v831 = vsel %vm830, %v822, %v827
    %v832 = vmul.f32 %v798, %v821
    %v833 = vmul.f32 %v799, %v831
    %v834 = vpack.c.bf16 %v833, %v832
    %v835 = vld [vmem:[#allocation2] sm:$0xf]
    %v836 = vld [vmem:[#allocation2 + $0x4] sm:$0xf]
    %v837 = vld [vmem:[#allocation2 + $0x8] sm:$0xf]
    %v838 = vld [vmem:[#allocation2 + $0xc] sm:$0xf]
    %v839 = vperm.slane %v43, 2
    %v844 = vunpack.c.l.b16 %v835
    %v845 = vunpack.c.l.b16 %v836
    %v846 = vunpack.c.l.b16 %v837
    %v847 = vunpack.c.l.b16 %v838
    %v848 = vpack.c.b16 %v845, %v844
    %v849 = vpack.c.b16 %v847, %v846
    %v853 = vsel %vm44, %v834, 0
    %855 = vmatpush.bf16.msra.mxu0 0
    %856 = vmatpush.bf16.msra.mxu0 0
    %857 = vmatpush.bf16.msra.mxu0 0
    %858 = vmatpush.bf16.msra.mxu0 0
    %859 = vmatpush.bf16.msra.mxu0 0
    %860 = vmatpush.bf16.msra.mxu0 0
    %861 = vmatpush.bf16.msra.mxu0 %v849
    %862 = vmatpush.bf16.msra.mxu0 %v848
    %863 = vmatmul.bf16.gmra.mxu0 %v853
    %v864 = vpop.f32.mrf.mxu0
    %v865 = vadd.f32 %v839, %v864
    %v866 = vpop.f32.mrf.mxu0
    %v867 = vadd.f32 %v839, %v866
    %868 = vdwg.mxu0
    %v869 = vmul.f32 %v865, 0.5
    %v870 = vmul.f32 %v867, 0.5
    %v871 = vmul.f32 %v865, 0.044715
    %v872 = vmul.f32 %v867, 0.044715
    %v873 = vmul.f32 %v871, %v865
    %v874 = vmul.f32 %v872, %v867
    %v875 = vmul.f32 %v873, %v865
    %v876 = vmul.f32 %v874, %v867
    %v877 = vadd.f32 %v865, %v875
    %v878 = vadd.f32 %v867, %v876
    %v879 = vmul.f32 %v877, 0.7978846
    %v880 = vmul.f32 %v878, 0.7978846
    %v881 = vtanh.pop %v879
    %v882 = vtanh.pop %v880
    %v883 = vadd.f32 %v881, 1.0
    %v884 = vadd.f32 %v882, 1.0
    %v885 = vmul.f32 %v869, %v883
    %v886 = vmul.f32 %v870, %v884
    %v887 = vpack.c.bf16 %v886, %v885
    %v888 = vld [vmem:[%s4] sm:$0xf]
    %v889 = vld [vmem:[%s4 + $0x4] sm:$0xf]
    %v890 = vld [vmem:[%s4 + $0x8] sm:$0xf]
    %v891 = vld [vmem:[%s4 + $0xc] sm:$0xf]
    %v892 = vld [vmem:[%s4 + $0x10] sm:$0xf]
    %v893 = vld [vmem:[%s4 + $0x14] sm:$0xf]
    %v894 = vld [vmem:[%s4 + $0x18] sm:$0xf]
    %v895 = vld [vmem:[%s4 + $0x1c] sm:$0xf]
    %v896 = vperm.slane %v43, 3
    %v905 = vunpack.c.l.b16 %v888
    %v906 = vunpack.c.l.b16 %v889
    %v907 = vunpack.c.l.b16 %v890
    %v908 = vunpack.c.l.b16 %v891
    %v909 = vunpack.c.l.b16 %v892
    %v910 = vunpack.c.l.b16 %v893
    %v911 = vunpack.c.l.b16 %v894
    %v912 = vunpack.c.l.b16 %v895
    %v913 = vpack.c.b16 %v906, %v905
    %v914 = vpack.c.b16 %v908, %v907
    %v915 = vpack.c.b16 %v910, %v909
    %v916 = vpack.c.b16 %v912, %v911
    %vm921 = vcmask 523264
    %v923 = vsel %vm921, %v887, 0
    %925 = vmatpush.bf16.msra.mxu0 0
    %926 = vmatpush.bf16.msra.mxu0 0
    %927 = vmatpush.bf16.msra.mxu0 0
    %928 = vmatpush.bf16.msra.mxu0 0
    %929 = vmatpush.bf16.msra.mxu0 %v916
    %930 = vmatpush.bf16.msra.mxu0 %v915
    %931 = vmatpush.bf16.msra.mxu0 %v914
    %932 = vmatpush.bf16.msra.mxu0 %v913
    %933 = vmatmul.bf16.gmra.mxu0 %v923
    %v934 = vpop.f32.mrf.mxu0
    %v935 = vadd.f32 %v896, %v934
    %v936 = vpop.f32.mrf.mxu0
    %v937 = vadd.f32 %v896, %v936
    %938 = vdwg.mxu0
    %v939 = vmul.f32 %v935, 0.5
    %v940 = vmul.f32 %v937, 0.5
    %v941 = vmul.f32 %v935, 0.044715
    %v942 = vmul.f32 %v937, 0.044715
    %v943 = vmul.f32 %v941, %v935
    %v944 = vmul.f32 %v942, %v937
    %v945 = vmul.f32 %v943, %v935
    %v946 = vmul.f32 %v944, %v937
    %v947 = vadd.f32 %v935, %v945
    %v948 = vadd.f32 %v937, %v946
    %v949 = vmul.f32 %v947, 0.7978846
    %v950 = vmul.f32 %v948, 0.7978846
    %v951 = vtanh.pop %v949
    %v952 = vtanh.pop %v950
    %v953 = vadd.f32 %v951, 1.0
    %v954 = vadd.f32 %v952, 1.0
    %v955 = vmul.f32 %v939, %v953
    %v956 = vmul.f32 %v940, %v954
    %v957 = vadd.f32 %v955, %v788
    %v958 = vadd.f32 %v956, %v789
    %959 = vst.msk [vmem:[#allocation5] sm:$0xff] %vm44, %v957
    %960 = vst.msk [vmem:[#allocation5 + $0x8] sm:$0xff] %vm44, %v958
    // Predicated region
    $region30: #{tpu_custom_call.1} parent=1 // pred_check
      _
    $region31: #{tpu_custom_call.1} parent=1 // pred_check_branch
      %962 = sbr.rel (0) target = $region33
    $region32: #{tpu_custom_call.1} parent=1 // pred_region
      %964 = vsyncadd [#allocation4], 0
      %s965 = sshll.u32 [#allocation5], 4
      %s966 = int_to_ptr.vmem [resolvable:$true] %s965
      %s967 = sshll.u32 %s6, 4
      %s968 = int_to_ptr.hbm [resolvable:$true] %s967
      %973 = dma.vmem_to_hbm [thread:$0]  %s966, 256, %s968, [#allocation4], 128, 128, 8
    $region33: #{tpu_custom_call.1} parent=1 // pred_fallthru
      _
    // Predicated region
    $region34: #{tpu_custom_call.1} parent=1 // pred_check
      _
    $region35: #{tpu_custom_call.1} parent=1 // pred_check_branch
      %975 = sbr.rel (0) target = $region37
    $region36: #{tpu_custom_call.1} parent=1 // pred_region
      %977 = dma.done [#allocation4], 256
    $region37: #{tpu_custom_call.1} parent=1 // pred_fallthru
      _
    %978 = vsyncpa [#allocation3], 1
    %979 = vsyncpa [#allocation4], 1

</llo_original>
